<compile_context>
chip_gen: v7x
topology: tpu7x:2x2x1
jax: 0.10.0
libtpu: 0.0.40
codegen_flags: <defaults>
</compile_context>

<pallas_src>
import functools

import jax
import jax.numpy as jnp
import jax.scipy.linalg as jsl
from jax.experimental import pallas as pl
from jax.experimental.pallas import tpu as pltpu


# ----------------------------------------------------------------------------
# Small helpers
# ----------------------------------------------------------------------------
def _cdiv(a, b):
    return -(-a // b)


def _round_up(x, m):
    return _cdiv(x, m) * m


def _pick_tile(n, preferred=512, min_blocks=1):
    """Lane/MXU-friendly tile (multiple of 128), as large as `preferred`.

    These kernels are HBM-writeback bound, so bigger tiles are better
    (measured ~63% of roofline at 256 vs ~85% at 512).  `min_blocks>1` keeps
    at least that many blocks on a *parallel* grid axis so the v7x megacore
    (2 TCs) has work to shard; it is a no-op on v5e / v6e.
    """
    n = max(int(n), 1)
    t = min(preferred, _round_up(n, 128))
    if min_blocks > 1 and n > 128:
        t = min(t, _round_up(_cdiv(n, min_blocks), 128))
    return max(t, 128)


def _kd_tiles(kd):
    """(padded contraction length, contraction tile) with tile | padded."""
    kd_pad = _round_up(max(int(kd), 1), 128)
    if kd_pad <= 1024:
        return kd_pad, kd_pad               # single K step (common GP case)
    # Large K*D: tile the contraction so (tm+tn)*tkd stays VMEM-bounded
    # (v7x only has 64 MiB physical VMEM).
    tkd = 512
    return _round_up(kd, tkd), tkd


def _fit2d(x, rows, cols):
    """Slice/zero-pad a 2-D array to exactly (rows, cols); no-op if it fits."""
    r, c = x.shape
    if r > rows or c > cols:
        x = x[:min(r, rows), :min(c, cols)]
        r, c = x.shape
    if r == rows and c == cols:
        return x
    return jnp.pad(x, ((0, rows - r), (0, cols - c)))


def _scaled_features(x, inv_ls):
    """Concatenated per-kernel scaled features: (N, K*D) f32."""
    n, d = x.shape
    nk = inv_ls.shape[0]
    return (x[:, None, :] * inv_ls[None, :, :]).reshape(n, nk * d).astype(
        jnp.float32)


def _compiler_params(semantics, live_block_bytes):
    # Cover the (double-buffered) working set with the scoped-VMEM limit —
    # needed on v5e whose scoped default is only 16 MiB; capped at 48 MiB so it
    # stays inside v7x's 64 MiB physical VMEM.
    vmem = int(live_block_bytes) + (8 << 20)
    vmem = min(max(vmem, 32 << 20), 48 << 20)
    return pltpu.CompilerParams(dimension_semantics=semantics,
                                vmem_limit_bytes=vmem)


# ----------------------------------------------------------------------------
# Kernel 1: fused product-of-RBF covariance
#   cov = scale * exp(-0.5 * (||a||^2 + ||b||^2 - 2 a.b)) over concatenated
#   scaled features; the K*D contraction is an "arbitrary" grid axis with an
#   f32 VMEM accumulator.  Optional noise on the GLOBAL diagonal (only on
#   diagonal-intersecting blocks).
# ----------------------------------------------------------------------------
def _covar_kernel(a_ref, b_ref, sqa_ref, sqb_ref, params_ref, out_ref, acc_ref,
                  *, add_noise):
    i = pl.program_id(0)
    j = pl.program_id(1)
    kk = pl.program_id(2)
    nkk = pl.num_programs(2)
    tm, tn = out_ref.shape

    @pl.when(kk == 0)
    def _():
        acc_ref[...] = jnp.zeros_like(acc_ref)

    # cross tile: contract the scaled-feature axis (flash-style trans_b dot).
    acc_ref[...] += jax.lax.dot_general(
        a_ref[...], b_ref[...], (((1,), (1,)), ((), ())),
        preferred_element_type=jnp.float32)

    @pl.when(kk == nkk - 1)
    def _():
        scale = params_ref[0]
        d2 = jnp.maximum(sqa_ref[...] + sqb_ref[...] - 2.0 * acc_ref[...], 0.0)
        cov = scale * jnp.exp(-0.5 * d2)           # single EUP exp per element
        out_ref[...] = cov
        if add_noise:
            noise = params_ref[1]
            row0 = i * tm
            col0 = j * tn
            on_diag = jnp.logical_and(row0 < col0 + tn, col0 < row0 + tm)

            @pl.when(on_diag)   # only diagonal blocks pay the iota/select
            def _():
                row = row0 + jax.lax.broadcasted_iota(jnp.int32, (tm, tn), 0)
                col = col0 + jax.lax.broadcasted_iota(jnp.int32, (tm, tn), 1)
                out_ref[...] = cov + jnp.where(row == col, noise, 0.0)


def compute_covar(x1, x2, inv_ls, scale, noise=None, tile_m=None, tile_n=None,
                  return_padded=False):
    """scale * prod_k exp(-0.5*||(x1-x2)*inv_ls_k||^2)  (+ noise*I if given).

    NOTE: the diagonal-noise add targets the *global* diagonal, i.e. it is only
    meaningful when x1 and x2 are the same points (how the GP forward uses it).
    """
    n1 = x1.shape[0]
    n2 = x2.shape[0]
    a = _scaled_features(x1, inv_ls)
    b = _scaled_features(x2, inv_ls)
    kd = a.shape[1]
    kd_pad, tkd = _kd_tiles(kd)

    tm = tile_m or _pick_tile(n1, min_blocks=2)
    tn = tile_n or _pick_tile(n2)
    n1p = _round_up(n1, tm)
    n2p = _round_up(n2, tn)

    a_p = _fit2d(a, n1p, kd_pad)
    b_p = _fit2d(b, n2p, kd_pad)
    # X2/X1-invariant terms hoisted out of the grid.
    sq_a = jnp.sum(a_p * a_p, axis=-1, keepdims=True)            # (n1p, 1)
    sq_b = jnp.sum(b_p * b_p, axis=-1)[None, :]                  # (1, n2p)

    add_noise = noise is not None
    if add_noise and n1 != n2:
        raise ValueError("noise is only valid for square K(X, X)")
    noise_val = noise if add_noise else 0.0
    params = jnp.stack([jnp.asarray(scale, jnp.float32),
                        jnp.asarray(noise_val, jnp.float32)])

    grid = (n1p // tm, n2p // tn, kd_pad // tkd)
    block_bytes = 4 * (2 * (tm * tkd + tn * tkd + tm + tn + tm * tn) + tm * tn)
    cost = pl.CostEstimate(
        flops=2 * n1p * n2p * kd_pad,
        transcendentals=n1p * n2p,
        bytes_accessed=4 * (n1p * kd_pad + n2p * kd_pad + n1p + n2p + n1p * n2p))

    out = pl.pallas_call(
        functools.partial(_covar_kernel, add_noise=add_noise),
        out_shape=jax.ShapeDtypeStruct((n1p, n2p), jnp.float32),
        grid=grid,
        in_specs=[
            pl.BlockSpec((tm, tkd), lambda i, j, kk: (i, kk)),      # scaled x1
            pl.BlockSpec((tn, tkd), lambda i, j, kk: (j, kk)),      # scaled x2
            pl.BlockSpec((tm, 1), lambda i, j, kk: (i, 0)),         # ||a||^2
            pl.BlockSpec((1, tn), lambda i, j, kk: (0, j)),         # ||b||^2
            pl.BlockSpec(memory_space=pltpu.MemorySpace.SMEM),      # [scale, noise]
        ],
        out_specs=pl.BlockSpec((tm, tn), lambda i, j, kk: (i, j)),
        scratch_shapes=[pltpu.VMEM((tm, tn), jnp.float32)],
        compiler_params=_compiler_params(("parallel", "parallel", "arbitrary"),
                                         block_bytes),
        cost_estimate=cost,
    )(a_p, b_p, sq_a, sq_b, params)

    if return_padded:
        return out
    return out[:n1, :n2]


# ----------------------------------------------------------------------------
# Kernel 2: fused cross-covariance (emitted transposed) + predictive mean
#   kt   = K(X, X_test)            (so cho_solve never needs an XLA k_star.T)
#   mean = K(X_test, X) @ alpha + mean_const   (lane-dense (1, NT) row,
#          accumulated while the covariance tile is still in vregs)
# ----------------------------------------------------------------------------
def _kstar_mean_kernel(a_ref, b_ref, sqa_ref, sqb_ref, alpha_ref, params_ref,
                       *refs, emit_kt):
    if emit_kt:
        kt_ref, mean_ref, acc_ref = refs
    else:
        mean_ref, acc_ref = refs
    j = pl.program_id(1)
    kk = pl.program_id(2)
    nkk = pl.num_programs(2)

    @pl.when(jnp.logical_and(j == 0, kk == 0))
    def _():
        mean_ref[...] = jnp.full_like(mean_ref, params_ref[1])

    @pl.when(kk == 0)
    def _():
        acc_ref[...] = jnp.zeros_like(acc_ref)

    # cross^T tile (tn, tm): contract the scaled-feature axis, already in the
    # k_star^T orientation (no transpose anywhere).
    acc_ref[...] += jax.lax.dot_general(
        b_ref[...], a_ref[...], (((1,), (1,)), ((), ())),
        preferred_element_type=jnp.float32)

    @pl.when(kk == nkk - 1)
    def _():
        scale = params_ref[0]
        d2 = jnp.maximum(sqb_ref[...] + sqa_ref[...] - 2.0 * acc_ref[...], 0.0)
        cov_t = scale * jnp.exp(-0.5 * d2)            # (tn, tm) = k_star^T tile
        if emit_kt:
            kt_ref[...] = cov_t
        # Fused GEMV: no separate kernel re-reading k_star from HBM.
        mean_ref[...] += jnp.dot(alpha_ref[...], cov_t,
                                 preferred_element_type=jnp.float32)


def compute_kstar_t_and_mean(x_test, x_train, inv_ls, scale, alpha, mean_scalar,
                             return_kt=True, tile_nt=None, tile_n=None):
    """Returns (K(X, X_test) padded to (Np, NTp) or None, pred_mean (NT,))."""
    nt = x_test.shape[0]
    n = x_train.shape[0]
    a = _scaled_features(x_test, inv_ls)      # rows of k_star   (grid axis i)
    b = _scaled_features(x_train, inv_ls)     # cols of k_star   (grid axis j)
    kd = a.shape[1]
    kd_pad, tkd = _kd_tiles(kd)

    tm = tile_nt or _pick_tile(nt, min_blocks=2)
    tn = tile_n or _pick_tile(n)
    ntp = _round_up(nt, tm)
    np_ = _round_up(n, tn)

    a_p = _fit2d(a, ntp, kd_pad)
    b_p = _fit2d(b, np_, kd_pad)
    sq_a = jnp.sum(a_p * a_p, axis=-1)[None, :]                  # (1, ntp)
    sq_b = jnp.sum(b_p * b_p, axis=-1, keepdims=True)            # (np_, 1)
    alpha_row = _fit2d(jnp.asarray(alpha, jnp.float32).reshape(1, -1), 1, np_)
    params = jnp.stack([jnp.asarray(scale, jnp.float32),
                        jnp.asarray(mean_scalar, jnp.float32)])

    grid = (ntp // tm, np_ // tn, kd_pad // tkd)
    out_shapes = []
    out_specs = []
    if return_kt:
        out_shapes.append(jax.ShapeDtypeStruct((np_, ntp), jnp.float32))
        out_specs.append(pl.BlockSpec((tn, tm), lambda i, j, kk: (j, i)))
    out_shapes.append(jax.ShapeDtypeStruct((1, ntp), jnp.float32))
    out_specs.append(pl.BlockSpec((1, tm), lambda i, j, kk: (0, i)))

    block_bytes = 4 * (2 * (tm * tkd + tn * tkd + tm + 2 * tn + tn * tm + tm)
                       + tn * tm)
    cost = pl.CostEstimate(
        flops=2 * ntp * np_ * kd_pad + 2 * ntp * np_,
        transcendentals=ntp * np_,
        bytes_accessed=4 * (ntp * kd_pad + np_ * kd_pad + ntp + 2 * np_
                            + (np_ * ntp if return_kt else 0) + ntp))

    outs = pl.pallas_call(
        functools.partial(_kstar_mean_kernel, emit_kt=return_kt),
        out_shape=tuple(out_shapes),
        grid=grid,
        in_specs=[
            pl.BlockSpec((tm, tkd), lambda i, j, kk: (i, kk)),    # scaled X_test
            pl.BlockSpec((tn, tkd), lambda i, j, kk: (j, kk)),    # scaled X
            pl.BlockSpec((1, tm), lambda i, j, kk: (0, i)),       # ||a||^2 row
            pl.BlockSpec((tn, 1), lambda i, j, kk: (j, 0)),       # ||b||^2 col
            pl.BlockSpec((1, tn), lambda i, j, kk: (0, j)),       # alpha row
            pl.BlockSpec(memory_space=pltpu.MemorySpace.SMEM),    # [scale, mean]
        ],
        out_specs=tuple(out_specs),
        scratch_shapes=[pltpu.VMEM((tn, tm), jnp.float32)],
        compiler_params=_compiler_params(("parallel", "arbitrary", "arbitrary"),
                                         block_bytes),
        cost_estimate=cost,
    )(a_p, b_p, sq_a, sq_b, alpha_row, params)

    if return_kt:
        kt_pad, mean_row = outs
    else:
        (mean_row,) = outs
        kt_pad = None
    return kt_pad, mean_row[0, :nt]


# ----------------------------------------------------------------------------
# Kernel 3: posterior predictive covariance
#   pred_cov = k_star_star - k_star @ v + noise * I   (k_star given transposed;
#   the tile transpose is an XLU op overlapped with the MXU contraction).
#   Reduction over N is an "arbitrary" grid axis accumulating into the resident
#   f32 output block.  Accepts already-padded inputs (no slice/re-pad passes).
# ----------------------------------------------------------------------------
def _pred_cov_kernel(kt_ref, v_ref, kss_ref, params_ref, cov_ref):
    i = pl.program_id(0)
    j = pl.program_id(1)
    k = pl.program_id(2)
    nk = pl.num_programs(2)
    ti, tj = cov_ref.shape

    @pl.when(k == 0)
    def _():
        cov_ref[...] = kss_ref[...]

    cov_ref[...] -= jnp.dot(kt_ref[...].T, v_ref[...],
                            preferred_element_type=jnp.float32)

    @pl.when(k == nk - 1)
    def _():
        noise = params_ref[0]
        row0 = i * ti
        col0 = j * tj
        on_diag = jnp.logical_and(row0 < col0 + tj, col0 < row0 + ti)

        @pl.when(on_diag)
        def _():
            row = row0 + jax.lax.broadcasted_iota(jnp.int32, (ti, tj), 0)
            col = col0 + jax.lax.broadcasted_iota(jnp.int32, (ti, tj), 1)
            cov_ref[...] += jnp.where(row == col, noise, 0.0)


def predict_cov(kt, kss, v, noise, *, nt, n, tile_nt=None, tile_n=None):
    ti = tile_nt or _pick_tile(nt, min_blocks=2)
    tk = tile_n or _pick_tile(n)
    ntp = _round_up(nt, ti)
    np_ = _round_up(n, tk)

    kt_p = _fit2d(kt, np_, ntp)                                   # no-op if padded
    v_p = _fit2d(jnp.asarray(v, jnp.float32), np_, ntp)
    kss_p = _fit2d(kss, ntp, ntp)                                 # no-op if padded
    params = jnp.asarray(noise, jnp.float32).reshape(1)

    block_bytes = 4 * 2 * (2 * tk * ti + 2 * ti * ti)
    cost = pl.CostEstimate(
        flops=2 * ntp * ntp * np_,
        transcendentals=0,
        bytes_accessed=4 * (2 * np_ * ntp + 2 * ntp * ntp))

    cov = pl.pallas_call(
        _pred_cov_kernel,
        out_shape=jax.ShapeDtypeStruct((ntp, ntp), jnp.float32),
        grid=(ntp // ti, ntp // ti, np_ // tk),
        in_specs=[
            pl.BlockSpec((tk, ti), lambda i, j, k: (k, i)),       # k_star^T
            pl.BlockSpec((tk, ti), lambda i, j, k: (k, j)),       # v
            pl.BlockSpec((ti, ti), lambda i, j, k: (i, j)),       # k_star_star
            pl.BlockSpec(memory_space=pltpu.MemorySpace.SMEM),    # [noise]
        ],
        out_specs=pl.BlockSpec((ti, ti), lambda i, j, k: (i, j)),
        compiler_params=_compiler_params(("parallel", "parallel", "arbitrary"),
                                         block_bytes),
        cost_estimate=cost,
    )(kt_p, v_p, kss_p, params)
    return cov[:nt, :nt]


# ----------------------------------------------------------------------------
# GP module (parameters + forward), mirroring nsgptorch GP.__init__ shapes
# ----------------------------------------------------------------------------
def init_gp_params(num_kernels, dim, noise_lower_bound=1e-5):
    raw_ls = (jnp.full((num_kernels, dim), 0.5, jnp.float32)
              + 0.1 * jnp.arange(num_kernels * dim,
                                 dtype=jnp.float32).reshape(num_kernels, dim))
    return {
        "raw_lengthscale": raw_ls,                      # per-kernel ARD lengthscales
        "raw_scale": jnp.asarray(0.3, jnp.float32),     # Scale()
        "raw_noise": jnp.asarray(-2.0, jnp.float32),    # Noise()
        "mean": jnp.zeros((1,), jnp.float32),           # self.mean
        "noise_lower_bound": noise_lower_bound,
    }


def gp_forward(params, X, y=None, X_test=None, return_cov=True, training=False):
    scale = jax.nn.softplus(params["raw_scale"])
    noise = jax.nn.softplus(params["raw_noise"]) + params["noise_lower_bound"]
    inv_ls = 1.0 / jax.nn.softplus(params["raw_lengthscale"])     # (K, D)
    mean = params["mean"]                                         # (1,)

    if training:
        covar = compute_covar(X, X, inv_ls, scale, noise=noise)
        mean_vec = jnp.broadcast_to(mean, (X.shape[0],))
        # TODO(synk): torch returns MultivariateNormal(mean, covar); no Pallas/JAX
        # distribution object here, so we return its defining parameters.
        return mean_vec, covar

    # eval mode: GP posterior predictive
    n = X.shape[0]
    nt = X_test.shape[0]
    t_n = _pick_tile(n)
    t_nt = _pick_tile(nt, min_blocks=2)

    K = compute_covar(X, X, inv_ls, scale, noise=noise)           # exact (n, n)
    # TODO(synk): dense Cholesky / cholesky_solve are sequential triangular
    # factorizations with no clean Pallas TPU equivalent; kept in XLA linalg.
    L = jnp.linalg.cholesky(K)
    alpha = jsl.cho_solve((L, True), y.reshape(-1, 1) - mean[0])  # (n, 1)

    kt_pad, pred_mean = compute_kstar_t_and_mean(
        X_test, X, inv_ls, scale, alpha, mean[0],
        return_kt=return_cov, tile_nt=t_nt, tile_n=t_n)
    if not return_cov:
        return pred_mean

    kss_pad = compute_covar(X_test, X_test, inv_ls, scale, noise=None,
                            tile_m=t_nt, tile_n=t_nt, return_padded=True)
    # k_star^T comes straight out of the fused kernel — no XLA transpose pass.
    v = jsl.cho_solve((L, True), kt_pad[:n, :nt])                 # (n, nt)
    pred_cov = predict_cov(kt_pad, kss_pad, v, noise,
                           nt=nt, n=n, tile_nt=t_nt, tile_n=t_n)
    return pred_mean, pred_cov


# ----------------------------------------------------------------------------
# Pure-JAX reference of the torch forward (for numerical verification)
# ----------------------------------------------------------------------------
def _reference_covar(x1, x2, inv_ls, scale, noise=None):
    cov = jnp.ones((x1.shape[0], x2.shape[0]), jnp.float32)
    for k in range(inv_ls.shape[0]):
        a = x1 * inv_ls[k]
        b = x2 * inv_ls[k]
        d2 = (jnp.sum(a * a, -1, keepdims=True) + jnp.sum(b * b, -1)[None, :]
              - 2.0 * a @ b.T)
        cov = cov * jnp.exp(-0.5 * jnp.maximum(d2, 0.0))
    cov = scale * cov
    if noise is not None:
        cov = cov + noise * jnp.eye(x1.shape[0], x2.shape[0], dtype=jnp.float32)
    return cov


def _reference_forward(params, X, y, X_test):
    scale = jax.nn.softplus(params["raw_scale"])
    noise = jax.nn.softplus(params["raw_noise"]) + params["noise_lower_bound"]
    inv_ls = 1.0 / jax.nn.softplus(params["raw_lengthscale"])
    mean = params["mean"]
    K = _reference_covar(X, X, inv_ls, scale, noise)
    L = jnp.linalg.cholesky(K)
    alpha = jsl.cho_solve((L, True), y.reshape(-1, 1) - mean[0])
    k_star = _reference_covar(X_test, X, inv_ls, scale)
    k_ss = _reference_covar(X_test, X_test, inv_ls, scale)
    v = jsl.cho_solve((L, True), k_star.T)
    pm = (k_star @ alpha).ravel() + mean[0]
    pc = k_ss - k_star @ v + noise * jnp.eye(X_test.shape[0], dtype=jnp.float32)
    return K, pm, pc


# ----------------------------------------------------------------------------
if __name__ == "__main__":
    def run_case(n, d, nt, num_kernels, key):
        kx, ky, ktst = jax.random.split(key, 3)
        X = jax.random.normal(kx, (n, d), jnp.float32)
        y = jax.random.normal(ky, (n,), jnp.float32)
        X_test = jax.random.normal(ktst, (nt, d), jnp.float32)
        params = init_gp_params(num_kernels, d)

        # training-mode forward: (mean vector, prior covariance) of the MVN
        mean_vec, prior_cov = gp_forward(params, X, training=True)
        # eval-mode forward: posterior predictive mean / covariance
        pred_mean, pred_cov = gp_forward(params, X, y=y, X_test=X_test,
                                         return_cov=True, training=False)
        # mean-only eval path (return_cov=False)
        pred_mean_only = gp_forward(params, X, y=y, X_test=X_test,
                                    return_cov=False, training=False)
        jax.block_until_ready((mean_vec, prior_cov, pred_mean, pred_cov,
                               pred_mean_only))

        # shape / finiteness checks
        assert mean_vec.shape == (n,)
        assert prior_cov.shape == (n, n)
        assert pred_mean.shape == (nt,)
        assert pred_cov.shape == (nt, nt)
        assert pred_mean_only.shape == (nt,)
        assert bool(jnp.all(jnp.isfinite(prior_cov)))
        assert bool(jnp.all(jnp.isfinite(pred_mean)))
        assert bool(jnp.all(jnp.isfinite(pred_cov)))

        # numerical check against a pure-JAX reference of the torch forward
        K_ref, pm_ref, pc_ref = _reference_forward(params, X, y, X_test)
        assert jnp.allclose(prior_cov, K_ref, atol=1e-3, rtol=1e-3)
        assert jnp.allclose(pred_mean, pm_ref, atol=1e-3, rtol=1e-3)
        assert jnp.allclose(pred_mean_only, pm_ref, atol=1e-3, rtol=1e-3)
        assert jnp.allclose(pred_cov, pc_ref, atol=1e-3, rtol=1e-3)

    key = jax.random.PRNGKey(0)
    k1, k2 = jax.random.split(key)
    run_case(n=16, d=4, nt=16, num_kernels=2, key=k1)   # tiny, single tile
    run_case(n=48, d=3, nt=20, num_kernels=3, key=k2)   # exercises pad / slice
    print("KERNEL_OK")
</pallas_src>

<mosaic_0001>
module attributes {stable_mosaic.version = 11 : i64} {
  func.func @_covar_kernel(%arg0: i32, %arg1: i32, %arg2: i32, %arg3: memref<128x128xf32, #tpu.memory_space<vmem>>, %arg4: memref<128x128xf32, #tpu.memory_space<vmem>>, %arg5: memref<128x1xf32, #tpu.memory_space<vmem>>, %arg6: memref<1x128xf32, #tpu.memory_space<vmem>>, %arg7: memref<2xf32, #tpu.memory_space<smem>>, %arg8: memref<128x128xf32, #tpu.memory_space<vmem>>, %arg9: memref<128x128xf32, #tpu.memory_space<vmem>>) attributes {dimension_semantics = [#tpu.dimension_semantics<parallel>, #tpu.dimension_semantics<parallel>, #tpu.dimension_semantics<arbitrary>], iteration_bounds = array<i64: 1, 1, 1>, scalar_prefetch = 0 : i64, scratch_operands = 1 : i64, tpu.core_type = #tpu.core_type<tc>, window_params = [{transform_indices = @transform_0, window_bounds = array<i64: 128, 128>}, {transform_indices = @transform_1, window_bounds = array<i64: 128, 128>}, {transform_indices = @transform_2, window_bounds = array<i64: 128, 1>}, {transform_indices = @transform_3, window_bounds = array<i64: 1, 128>}, {transform_indices = @transform_4, window_bounds = array<i64: 2>}, {transform_indices = @transform_5, window_bounds = array<i64: 128, 128>}]} {
    %c0_i32 = arith.constant 0 : i32
    %0 = arith.cmpi eq, %arg2, %c0_i32 : i32
    %1 = arith.extui %0 : i1 to i32
    %c0_i32_0 = arith.constant 0 : i32
    %2 = arith.cmpi ne, %1, %c0_i32_0 : i32
    scf.if %2 {
      %cst_10 = arith.constant 0.000000e+00 : f32
      %12 = vector.broadcast %cst_10 : f32 to vector<128x128xf32>
      %c0_11 = arith.constant 0 : index
      %c0_12 = arith.constant 0 : index
      %13 = vector.load %arg9[%c0_11, %c0_12] : memref<128x128xf32, #tpu.memory_space<vmem>>, vector<128x128xf32>
      tpu.vector_store %arg9[%c0_11, %c0_12], %12 {strides = array<i32>} : memref<128x128xf32, #tpu.memory_space<vmem>>, vector<128x128xf32>,
    } else {
    }
    %c0 = arith.constant 0 : index
    %c0_1 = arith.constant 0 : index
    %3 = vector.load %arg9[%c0, %c0_1] : memref<128x128xf32, #tpu.memory_space<vmem>>, vector<128x128xf32>
    %c0_2 = arith.constant 0 : index
    %c0_3 = arith.constant 0 : index
    %4 = vector.load %arg3[%c0_2, %c0_3] : memref<128x128xf32, #tpu.memory_space<vmem>>, vector<128x128xf32>
    %c0_4 = arith.constant 0 : index
    %c0_5 = arith.constant 0 : index
    %5 = vector.load %arg4[%c0_4, %c0_5] : memref<128x128xf32, #tpu.memory_space<vmem>>, vector<128x128xf32>
    %cst = arith.constant dense<0.000000e+00> : vector<128x128xf32>
    %6 = tpu.matmul %4, %5, %cst {dimension_numbers = #tpu.dot_dimension_numbers<[1], [1], [0], [0], [0, 0, 1, 0], [], []>} : vector<128x128xf32>, vector<128x128xf32>, vector<128x128xf32> -> vector<128x128xf32>
    %7 = arith.addf %3, %6 : vector<128x128xf32>
    %c0_6 = arith.constant 0 : index
    %c0_7 = arith.constant 0 : index
    %8 = vector.load %arg9[%c0_6, %c0_7] : memref<128x128xf32, #tpu.memory_space<vmem>>, vector<128x128xf32>
    tpu.vector_store %arg9[%c0_6, %c0_7], %7 {strides = array<i32>} : memref<128x128xf32, #tpu.memory_space<vmem>>, vector<128x128xf32>,
    %c0_i32_8 = arith.constant 0 : i32
    %9 = arith.cmpi eq, %arg2, %c0_i32_8 : i32
    %10 = arith.extui %9 : i1 to i32
    %c0_i32_9 = arith.constant 0 : i32
    %11 = arith.cmpi ne, %10, %c0_i32_9 : i32
    scf.if %11 {
      %c0_10 = arith.constant 0 : index
      %12 = memref.load %arg7[%c0_10] : memref<2xf32, #tpu.memory_space<smem>>
      %c0_11 = arith.constant 0 : index
      %c0_12 = arith.constant 0 : index
      %13 = vector.load %arg5[%c0_11, %c0_12] : memref<128x1xf32, #tpu.memory_space<vmem>>, vector<128x1xf32>
      %c0_13 = arith.constant 0 : index
      %c0_14 = arith.constant 0 : index
      %14 = vector.load %arg6[%c0_13, %c0_14] : memref<1x128xf32, #tpu.memory_space<vmem>>, vector<1x128xf32>
      %15 = vector.broadcast %13 : vector<128x1xf32> to vector<128x128xf32>
      %16 = vector.broadcast %14 : vector<1x128xf32> to vector<128x128xf32>
      %17 = arith.addf %15, %16 : vector<128x128xf32>
      %c0_15 = arith.constant 0 : index
      %c0_16 = arith.constant 0 : index
      %18 = vector.load %arg9[%c0_15, %c0_16] : memref<128x128xf32, #tpu.memory_space<vmem>>, vector<128x128xf32>
      %cst_17 = arith.constant 2.000000e+00 : f32
      %19 = vector.broadcast %cst_17 : f32 to vector<128x128xf32>
      %20 = arith.mulf %19, %18 : vector<128x128xf32>
      %21 = arith.subf %17, %20 : vector<128x128xf32>
      %cst_18 = arith.constant 0.000000e+00 : f32
      %22 = vector.broadcast %cst_18 : f32 to vector<128x128xf32>
      %23 = arith.maximumf %21, %22 : vector<128x128xf32>
      %cst_19 = arith.constant -5.000000e-01 : f32
      %24 = vector.broadcast %cst_19 : f32 to vector<128x128xf32>
      %25 = arith.mulf %24, %23 : vector<128x128xf32>
      %26 = math.exp %25 : vector<128x128xf32>
      %27 = vector.broadcast %12 : f32 to vector<128x128xf32>
      %28 = arith.mulf %27, %26 : vector<128x128xf32>
      %c0_20 = arith.constant 0 : index
      %c0_21 = arith.constant 0 : index
      %29 = vector.load %arg8[%c0_20, %c0_21] : memref<128x128xf32, #tpu.memory_space<vmem>>, vector<128x128xf32>
      tpu.vector_store %arg8[%c0_20, %c0_21], %28 {strides = array<i32>} : memref<128x128xf32, #tpu.memory_space<vmem>>, vector<128x128xf32>,
      %c1 = arith.constant 1 : index
      %30 = memref.load %arg7[%c1] : memref<2xf32, #tpu.memory_space<smem>>
      %c128_i32 = arith.constant 128 : i32
      %31 = arith.muli %arg0, %c128_i32 : i32
      %c128_i32_22 = arith.constant 128 : i32
      %32 = arith.muli %arg1, %c128_i32_22 : i32
      %c128_i32_23 = arith.constant 128 : i32
      %33 = arith.addi %32, %c128_i32_23 : i32
      %34 = arith.cmpi slt, %31, %33 : i32
      %c128_i32_24 = arith.constant 128 : i32
      %35 = arith.addi %31, %c128_i32_24 : i32
      %36 = arith.cmpi slt, %32, %35 : i32
      %37 = arith.andi %34, %36 : i1
      %38 = arith.extui %37 : i1 to i32
      %c0_i32_25 = arith.constant 0 : i32
      %39 = arith.cmpi ne, %38, %c0_i32_25 : i32
      scf.if %39 {
        %40 = tpu.iota {dimensions = array<i32: 0>} : vector<128x128xi32>
        %41 = vector.broadcast %31 : i32 to vector<128x128xi32>
        %42 = arith.addi %41, %40 : vector<128x128xi32>
        %43 = tpu.iota {dimensions = array<i32: 1>} : vector<128x128xi32>
        %44 = vector.broadcast %32 : i32 to vector<128x128xi32>
        %45 = arith.addi %44, %43 : vector<128x128xi32>
        %46 = arith.cmpi eq, %42, %45 : vector<128x128xi32>
        %cst_26 = arith.constant 0.000000e+00 : f32
        %47 = vector.broadcast %30 : f32 to vector<128x128xf32>
        %48 = vector.broadcast %cst_26 : f32 to vector<128x128xf32>
        %49 = arith.select %46, %47, %48 : vector<128x128xi1>, vector<128x128xf32>
        %50 = arith.addf %28, %49 : vector<128x128xf32>
        %c0_27 = arith.constant 0 : index
        %c0_28 = arith.constant 0 : index
        %51 = vector.load %arg8[%c0_27, %c0_28] : memref<128x128xf32, #tpu.memory_space<vmem>>, vector<128x128xf32>
        tpu.vector_store %arg8[%c0_27, %c0_28], %50 {strides = array<i32>} : memref<128x128xf32, #tpu.memory_space<vmem>>, vector<128x128xf32>,
      } else {
      }
    } else {
    }
    return
  }
  func.func @transform_0(%arg0: i32, %arg1: i32, %arg2: i32) -> (i32, i32) {
    %c0_i32 = arith.constant 0 : i32
    return %arg0, %arg2 : i32, i32
  }
  func.func @transform_1(%arg0: i32, %arg1: i32, %arg2: i32) -> (i32, i32) {
    %c0_i32 = arith.constant 0 : i32
    return %arg1, %arg2 : i32, i32
  }
  func.func @transform_2(%arg0: i32, %arg1: i32, %arg2: i32) -> (i32, i32) {
    %c0_i32 = arith.constant 0 : i32
    %c0_i32_0 = arith.constant 0 : i32
    return %arg0, %c0_i32 : i32, i32
  }
  func.func @transform_3(%arg0: i32, %arg1: i32, %arg2: i32) -> (i32, i32) {
    %c0_i32 = arith.constant 0 : i32
    %c0_i32_0 = arith.constant 0 : i32
    return %c0_i32, %arg1 : i32, i32
  }
  func.func @transform_4(%arg0: i32, %arg1: i32, %arg2: i32) -> i32 {
    %c0_i32 = arith.constant 0 : i32
    %c0_i32_0 = arith.constant 0 : i32
    return %c0_i32 : i32
  }
  func.func @transform_5(%arg0: i32, %arg1: i32, %arg2: i32) -> (i32, i32) {
    %c0_i32 = arith.constant 0 : i32
    return %arg0, %arg1 : i32, i32
  }
}

</mosaic_0001>

<llo_original>
// kernel: tpu_custom_call.1
$region0: #{tpu_custom_call.1}
  #allocation0 [shape = 'u32[]', space=smem, size = 0x4, offset = 0x4, fixed_abs, tag = 'smem constant byte address 0x4 - core index']
  #allocation1 [shape = 'u32[144,128]{1,0:T(1,128)}', space=vmem, size = 0x12000, scoped, tag = 'internal scratch']
  #allocation2 [shape = 'f32[128,128]{1,0:T(8,128)}', space=vmem, size = 0x10000, scoped, tag = 'scratch operand']
  %s0 = inlined_call_operand.vmem [shape: f32[128,128], index: 0, kind: input, shape index: {}]
  %s1 = inlined_call_operand.hbm [shape: f32[128,128], index: 1, kind: input, shape index: {}]
  %s2 = inlined_call_operand.vmem [shape: f32[128,1], index: 2, kind: input, shape index: {}]
  %s3 = inlined_call_operand.vmem [shape: f32[1,128], index: 3, kind: input, shape index: {}]
  %s4 = inlined_call_operand.vmem [shape: f32[2], index: 4, kind: input, shape index: {}]
  %s5 = inlined_call_operand.hbm [shape: f32[128,128], index: 5, kind: output, shape index: {}]
  %s6 = sld [smem:[#allocation0]]
  $region50: #{tpu_custom_call.1} parent=0
    _
  %s8 = ssub.s32 1, %s6
  %s9 = scalar_select 0, %s8, %s6
  $region1: #{tpu_custom_call.1} parent=0
    #allocation3 [shape = 'u8[65536]{0}', space=vmem, size = 0x10000, scoped, tag = 'input window, operand 1, single buffered']
    #allocation4 [shape = 's32[1]{0}', space=sflag, size = 0x4, scoped, tag = 'scoped memory for tpu_custom_call.1']
    #allocation5 [shape = 's32[1]{0}', space=sflag, size = 0x4, scoped, tag = 'scoped memory for tpu_custom_call.1']
    #allocation6 [shape = 's32[1]{0}', space=sflag, size = 0x4, scoped, tag = 'scoped memory for tpu_custom_call.1']
    #allocation7 [shape = 'u8[512]{0}', space=smem, size = 0x200, scoped, tag = 'input window, operand 4, single buffered']
    #allocation8 [shape = 'u8[65536]{0}', space=vmem, size = 0x10000, scoped, tag = 'output window, operand 0, single buffered']
    %10 = vsyncpa [#allocation4], 0
    %11 = vsyncpa [#allocation6], 0
    %12 = vsyncpa [#allocation5], 0
    // Predicated region
    $region2: #{tpu_custom_call.1} parent=1 // pred_check
      _
    $region3: #{tpu_custom_call.1} parent=1 // pred_check_branch
      %14 = sbr.rel (0) target = $region5
    $region4: #{tpu_custom_call.1} parent=1 // pred_region
      _
    $region5: #{tpu_custom_call.1} parent=1 // pred_fallthru
      _
    // Predicated region
    $region6: #{tpu_custom_call.1} parent=1 // pred_check
      _
    $region7: #{tpu_custom_call.1} parent=1 // pred_check_branch
      %16 = sbr.rel (0) target = $region9
    $region8: #{tpu_custom_call.1} parent=1 // pred_region
      %s18 = ssub.s32 2048, 2048
      %19 = vsyncadd [#allocation4], %s18
      %s20 = sshll.u32 [#allocation3], 4
      %s21 = int_to_ptr.vmem [resolvable:$true] %s20
      %26 = dma.hbm_to_vmem [thread:$0]  %s1, 2048, %s21, [#allocation4], 128, 128, 8
    $region9: #{tpu_custom_call.1} parent=1 // pred_fallthru
      _
    // Predicated region
    $region10: #{tpu_custom_call.1} parent=1 // pred_check
      _
    $region11: #{tpu_custom_call.1} parent=1 // pred_check_branch
      %28 = sbr.rel (0) target = $region13
    $region12: #{tpu_custom_call.1} parent=1 // pred_region
      _
    $region13: #{tpu_custom_call.1} parent=1 // pred_fallthru
      _
    // Predicated region
    $region14: #{tpu_custom_call.1} parent=1 // pred_check
      _
    $region15: #{tpu_custom_call.1} parent=1 // pred_check_branch
      %30 = sbr.rel (0) target = $region17
    $region16: #{tpu_custom_call.1} parent=1 // pred_region
      _
    $region17: #{tpu_custom_call.1} parent=1 // pred_fallthru
      _
    // Predicated region
    $region18: #{tpu_custom_call.1} parent=1 // pred_check
      _
    $region19: #{tpu_custom_call.1} parent=1 // pred_check_branch
      %32 = sbr.rel (0) target = $region21
    $region20: #{tpu_custom_call.1} parent=1 // pred_region
      %s34 = ssub.s32 16, 16
      %35 = vsyncadd [#allocation6], %s34
      %s37 = sshll.u32 %s4, 4
      %s38 = int_to_ptr.vmem [resolvable:$true] %s37
      %40 = dma.vmem_to_smem %s38, 16, [#allocation7], [#allocation6]
    $region21: #{tpu_custom_call.1} parent=1 // pred_fallthru
      _
    // Predicated region
    $region22: #{tpu_custom_call.1} parent=1 // pred_check
      _
    $region23: #{tpu_custom_call.1} parent=1 // pred_check_branch
      %42 = sbr.rel (0) target = $region25
    $region24: #{tpu_custom_call.1} parent=1 // pred_region
      %43 = dma.done [#allocation4], 2048
    $region25: #{tpu_custom_call.1} parent=1 // pred_fallthru
      _
    // Predicated region
    $region26: #{tpu_custom_call.1} parent=1 // pred_check
      _
    $region27: #{tpu_custom_call.1} parent=1 // pred_check_branch
      %45 = sbr.rel (0) target = $region29
    $region28: #{tpu_custom_call.1} parent=1 // pred_region
      %46 = dma.done [#allocation6], 16
    $region29: #{tpu_custom_call.1} parent=1 // pred_fallthru
      _
    %47 = sfence
    %p48 = scmp.eq.s32.totalorder 0, 0
    // Predicated region
    $region30: #{tpu_custom_call.1} parent=1 // pred_check
      %p49 = pneg %p48
    $region31: #{tpu_custom_call.1} parent=1 // pred_check_branch
      %51 = sbr.rel (%p49) target = $region33
    $region32: #{tpu_custom_call.1} parent=1 // pred_region
      %52 = vst [vmem:[#allocation2] sm:$0xff] 0.0
      %53 = vst [vmem:[#allocation2 + $0x8] sm:$0xff] 0.0
      %54 = vst [vmem:[#allocation2 + $0x10] sm:$0xff] 0.0
      %55 = vst [vmem:[#allocation2 + $0x18] sm:$0xff] 0.0
      %56 = vst [vmem:[#allocation2 + $0x20] sm:$0xff] 0.0
      %57 = vst [vmem:[#allocation2 + $0x28] sm:$0xff] 0.0
      %58 = vst [vmem:[#allocation2 + $0x30] sm:$0xff] 0.0
      %59 = vst [vmem:[#allocation2 + $0x38] sm:$0xff] 0.0
      %60 = vst [vmem:[#allocation2 + $0x40] sm:$0xff] 0.0
      %61 = vst [vmem:[#allocation2 + $0x48] sm:$0xff] 0.0
      %62 = vst [vmem:[#allocation2 + $0x50] sm:$0xff] 0.0
      %63 = vst [vmem:[#allocation2 + $0x58] sm:$0xff] 0.0
      %64 = vst [vmem:[#allocation2 + $0x60] sm:$0xff] 0.0
      %65 = vst [vmem:[#allocation2 + $0x68] sm:$0xff] 0.0
      %66 = vst [vmem:[#allocation2 + $0x70] sm:$0xff] 0.0
      %67 = vst [vmem:[#allocation2 + $0x78] sm:$0xff] 0.0
    $region33: #{tpu_custom_call.1} parent=1 // pred_fallthru
      _
    %v68 = vld [vmem:[#allocation2] sm:$0xff]
    %v69 = vld [vmem:[#allocation2 + $0x8] sm:$0xff]
    %v70 = vld [vmem:[#allocation2 + $0x10] sm:$0xff]
    %v71 = vld [vmem:[#allocation2 + $0x18] sm:$0xff]
    %v72 = vld [vmem:[#allocation2 + $0x20] sm:$0xff]
    %v73 = vld [vmem:[#allocation2 + $0x28] sm:$0xff]
    %v74 = vld [vmem:[#allocation2 + $0x30] sm:$0xff]
    %v75 = vld [vmem:[#allocation2 + $0x38] sm:$0xff]
    %v76 = vld [vmem:[#allocation2 + $0x40] sm:$0xff]
    %v77 = vld [vmem:[#allocation2 + $0x48] sm:$0xff]
    %v78 = vld [vmem:[#allocation2 + $0x50] sm:$0xff]
    %v79 = vld [vmem:[#allocation2 + $0x58] sm:$0xff]
    %v80 = vld [vmem:[#allocation2 + $0x60] sm:$0xff]
    %v81 = vld [vmem:[#allocation2 + $0x68] sm:$0xff]
    %v82 = vld [vmem:[#allocation2 + $0x70] sm:$0xff]
    %v83 = vld [vmem:[#allocation2 + $0x78] sm:$0xff]
    %v84 = vld [vmem:[%s0] sm:$0xff]
    %v85 = vld [vmem:[%s0 + $0x8] sm:$0xff]
    %v86 = vld [vmem:[%s0 + $0x10] sm:$0xff]
    %v87 = vld [vmem:[%s0 + $0x18] sm:$0xff]
    %v88 = vld [vmem:[%s0 + $0x20] sm:$0xff]
    %v89 = vld [vmem:[%s0 + $0x28] sm:$0xff]
    %v90 = vld [vmem:[%s0 + $0x30] sm:$0xff]
    %v91 = vld [vmem:[%s0 + $0x38] sm:$0xff]
    %v92 = vld [vmem:[%s0 + $0x40] sm:$0xff]
    %v93 = vld [vmem:[%s0 + $0x48] sm:$0xff]
    %v94 = vld [vmem:[%s0 + $0x50] sm:$0xff]
    %v95 = vld [vmem:[%s0 + $0x58] sm:$0xff]
    %v96 = vld [vmem:[%s0 + $0x60] sm:$0xff]
    %v97 = vld [vmem:[%s0 + $0x68] sm:$0xff]
    %v98 = vld [vmem:[%s0 + $0x70] sm:$0xff]
    %v99 = vld [vmem:[%s0 + $0x78] sm:$0xff]
    %v100 = vld [vmem:[#allocation3] sm:$0xff]
    %v101 = vld [vmem:[#allocation3 + $0x8] sm:$0xff]
    %v102 = vld [vmem:[#allocation3 + $0x10] sm:$0xff]
    %v103 = vld [vmem:[#allocation3 + $0x18] sm:$0xff]
    %v104 = vld [vmem:[#allocation3 + $0x20] sm:$0xff]
    %v105 = vld [vmem:[#allocation3 + $0x28] sm:$0xff]
    %v106 = vld [vmem:[#allocation3 + $0x30] sm:$0xff]
    %v107 = vld [vmem:[#allocation3 + $0x38] sm:$0xff]
    %v108 = vld [vmem:[#allocation3 + $0x40] sm:$0xff]
    %v109 = vld [vmem:[#allocation3 + $0x48] sm:$0xff]
    %v110 = vld [vmem:[#allocation3 + $0x50] sm:$0xff]
    %v111 = vld [vmem:[#allocation3 + $0x58] sm:$0xff]
    %v112 = vld [vmem:[#allocation3 + $0x60] sm:$0xff]
    %v113 = vld [vmem:[#allocation3 + $0x68] sm:$0xff]
    %v114 = vld [vmem:[#allocation3 + $0x70] sm:$0xff]
    %v115 = vld [vmem:[#allocation3 + $0x78] sm:$0xff]
    %116 = vmatprep.subr.mxu0 0.0
    %117 = vmatpush1.xpose.msra.mxu0 %v100
    %118 = vmatprep.subr.mxu0 0.0
    %119 = vmatpush1.xpose.msra.mxu0 %v101
    %120 = vmatprep.subr.mxu0 0.0
    %121 = vmatpush1.xpose.msra.mxu0 %v102
    %122 = vmatprep.subr.mxu0 0.0
    %123 = vmatpush1.xpose.msra.mxu0 %v103
    %124 = vmatprep.subr.mxu0 0.0
    %125 = vmatpush1.xpose.msra.mxu0 %v104
    %126 = vmatprep.subr.mxu0 0.0
    %127 = vmatpush1.xpose.msra.mxu0 %v105
    %128 = vmatprep.subr.mxu0 0.0
    %129 = vmatpush1.xpose.msra.mxu0 %v106
    %130 = vmatprep.subr.mxu0 0.0
    %131 = vmatpush1.xpose.msra.mxu0 %v107
    %132 = vmatprep.subr.mxu0 0.0
    %133 = vmatpush1.xpose.msra.mxu0 %v108
    %134 = vmatprep.subr.mxu0 0.0
    %135 = vmatpush1.xpose.msra.mxu0 %v109
    %136 = vmatprep.subr.mxu0 0.0
    %137 = vmatpush1.xpose.msra.mxu0 %v110
    %138 = vmatprep.subr.mxu0 0.0
    %139 = vmatpush1.xpose.msra.mxu0 %v111
    %140 = vmatprep.subr.mxu0 0.0
    %141 = vmatpush1.xpose.msra.mxu0 %v112
    %142 = vmatprep.subr.mxu0 0.0
    %143 = vmatpush1.xpose.msra.mxu0 %v113
    %144 = vmatprep.subr.mxu0 0.0
    %145 = vmatpush1.xpose.msra.mxu0 %v114
    %146 = vmatprep.subr.mxu0 0.0
    %147 = vmatpush1.xpose.msra.mxu0 %v115
    %148 = vmatprep.subr.mxu0 0.0
    %149 = vmatpush1.xpose.msra.mxu0 0.0
    %150 = vmatprep.subr.mxu0 0.0
    %151 = vmatpush1.xpose.msra.mxu0 0.0
    %152 = vmatprep.subr.mxu0 0.0
    %153 = vmatpush1.xpose.msra.mxu0 0.0
    %154 = vmatprep.subr.mxu0 0.0
    %155 = vmatpush1.xpose.msra.mxu0 0.0
    %156 = vmatprep.subr.mxu0 0.0
    %157 = vmatpush1.xpose.msra.mxu0 0.0
    %158 = vmatprep.subr.mxu0 0.0
    %159 = vmatpush1.xpose.msra.mxu0 0.0
    %160 = vmatprep.subr.mxu0 0.0
    %161 = vmatpush1.xpose.msra.mxu0 0.0
    %162 = vmatprep.subr.mxu0 0.0
    %163 = vmatpush1.xpose.msra.mxu0 0.0
    %164 = vmatprep.subr.mxu0 0.0
    %165 = vmatpush1.xpose.msra.mxu0 0.0
    %166 = vmatprep.subr.mxu0 0.0
    %167 = vmatpush1.xpose.msra.mxu0 0.0
    %168 = vmatprep.subr.mxu0 0.0
    %169 = vmatpush1.xpose.msra.mxu0 0.0
    %170 = vmatprep.subr.mxu0 0.0
    %171 = vmatpush1.xpose.msra.mxu0 0.0
    %172 = vmatprep.subr.mxu0 0.0
    %173 = vmatpush1.xpose.msra.mxu0 0.0
    %174 = vmatprep.subr.mxu0 0.0
    %175 = vmatpush1.xpose.msra.mxu0 0.0
    %176 = vmatprep.subr.mxu0 0.0
    %177 = vmatpush1.xpose.msra.mxu0 0.0
    %178 = vmatprep.subr.mxu0 0.0
    %179 = vmatpush1.xpose.msra.mxu0 0.0
    %180 = vmatprep.mubr.f32.mxu0 0.0
    %181 = vmatmul.mubr.f32.gmra.mrb[0].mxu0 %v84
    %v182 = vpop.f32.mrb[0].mxu0
    %v183 = vadd.f32 0.0, %v182
    %v184 = vpop.f32.mrb[0].mxu0
    %185 = vmatprep.mubr.f32.mxu0 0.0
    %186 = vmatmul.mubr.f32.gmra.mrb[0].mxu0 %v85
    %v187 = vpop.f32.mrb[0].mxu0
    %v188 = vadd.f32 0.0, %v187
    %v189 = vpop.f32.mrb[0].mxu0
    %190 = vmatprep.mubr.f32.mxu0 0.0
    %191 = vmatmul.mubr.f32.gmra.mrb[0].mxu0 %v86
    %v192 = vpop.f32.mrb[0].mxu0
    %v193 = vadd.f32 0.0, %v192
    %v194 = vpop.f32.mrb[0].mxu0
    %195 = vmatprep.mubr.f32.mxu0 0.0
    %196 = vmatmul.mubr.f32.gmra.mrb[0].mxu0 %v87
    %v197 = vpop.f32.mrb[0].mxu0
    %v198 = vadd.f32 0.0, %v197
    %v199 = vpop.f32.mrb[0].mxu0
    %200 = vmatprep.mubr.f32.mxu0 0.0
    %201 = vmatmul.mubr.f32.gmra.mrb[0].mxu0 %v88
    %v202 = vpop.f32.mrb[0].mxu0
    %v203 = vadd.f32 0.0, %v202
    %v204 = vpop.f32.mrb[0].mxu0
    %205 = vmatprep.mubr.f32.mxu0 0.0
    %206 = vmatmul.mubr.f32.gmra.mrb[0].mxu0 %v89
    %v207 = vpop.f32.mrb[0].mxu0
    %v208 = vadd.f32 0.0, %v207
    %v209 = vpop.f32.mrb[0].mxu0
    %210 = vmatprep.mubr.f32.mxu0 0.0
    %211 = vmatmul.mubr.f32.gmra.mrb[0].mxu0 %v90
    %v212 = vpop.f32.mrb[0].mxu0
    %v213 = vadd.f32 0.0, %v212
    %v214 = vpop.f32.mrb[0].mxu0
    %215 = vmatprep.mubr.f32.mxu0 0.0
    %216 = vmatmul.mubr.f32.gmra.mrb[0].mxu0 %v91
    %v217 = vpop.f32.mrb[0].mxu0
    %v218 = vadd.f32 0.0, %v217
    %v219 = vpop.f32.mrb[0].mxu0
    %220 = vmatprep.mubr.f32.mxu0 0.0
    %221 = vmatmul.mubr.f32.gmra.mrb[0].mxu0 %v92
    %v222 = vpop.f32.mrb[0].mxu0
    %v223 = vadd.f32 0.0, %v222
    %v224 = vpop.f32.mrb[0].mxu0
    %225 = vmatprep.mubr.f32.mxu0 0.0
    %226 = vmatmul.mubr.f32.gmra.mrb[0].mxu0 %v93
    %v227 = vpop.f32.mrb[0].mxu0
    %v228 = vadd.f32 0.0, %v227
    %v229 = vpop.f32.mrb[0].mxu0
    %230 = vmatprep.mubr.f32.mxu0 0.0
    %231 = vmatmul.mubr.f32.gmra.mrb[0].mxu0 %v94
    %v232 = vpop.f32.mrb[0].mxu0
    %v233 = vadd.f32 0.0, %v232
    %v234 = vpop.f32.mrb[0].mxu0
    %235 = vmatprep.mubr.f32.mxu0 0.0
    %236 = vmatmul.mubr.f32.gmra.mrb[0].mxu0 %v95
    %v237 = vpop.f32.mrb[0].mxu0
    %v238 = vadd.f32 0.0, %v237
    %v239 = vpop.f32.mrb[0].mxu0
    %240 = vmatprep.mubr.f32.mxu0 0.0
    %241 = vmatmul.mubr.f32.gmra.mrb[0].mxu0 %v96
    %v242 = vpop.f32.mrb[0].mxu0
    %v243 = vadd.f32 0.0, %v242
    %v244 = vpop.f32.mrb[0].mxu0
    %245 = vmatprep.mubr.f32.mxu0 0.0
    %246 = vmatmul.mubr.f32.gmra.mrb[0].mxu0 %v97
    %v247 = vpop.f32.mrb[0].mxu0
    %v248 = vadd.f32 0.0, %v247
    %v249 = vpop.f32.mrb[0].mxu0
    %250 = vmatprep.mubr.f32.mxu0 0.0
    %251 = vmatmul.mubr.f32.gmra.mrb[0].mxu0 %v98
    %v252 = vpop.f32.mrb[0].mxu0
    %v253 = vadd.f32 0.0, %v252
    %v254 = vpop.f32.mrb[0].mxu0
    %255 = vmatprep.mubr.f32.mxu0 0.0
    %256 = vmatmul.mubr.f32.gmra.mrb[0].mxu0 %v99
    %v257 = vpop.f32.mrb[0].mxu0
    %v258 = vadd.f32 0.0, %v257
    %v259 = vpop.f32.mrb[0].mxu0
    %260 = vdwg.mxu0
    %v261 = vadd.f32 %v68, %v183
    %v262 = vadd.f32 %v69, %v188
    %v263 = vadd.f32 %v70, %v193
    %v264 = vadd.f32 %v71, %v198
    %v265 = vadd.f32 %v72, %v203
    %v266 = vadd.f32 %v73, %v208
    %v267 = vadd.f32 %v74, %v213
    %v268 = vadd.f32 %v75, %v218
    %v269 = vadd.f32 %v76, %v223
    %v270 = vadd.f32 %v77, %v228
    %v271 = vadd.f32 %v78, %v233
    %v272 = vadd.f32 %v79, %v238
    %v273 = vadd.f32 %v80, %v243
    %v274 = vadd.f32 %v81, %v248
    %v275 = vadd.f32 %v82, %v253
    %v276 = vadd.f32 %v83, %v258
    %277 = vst [vmem:[#allocation2] sm:$0xff] %v261
    %278 = vst [vmem:[#allocation2 + $0x8] sm:$0xff] %v262
    %279 = vst [vmem:[#allocation2 + $0x10] sm:$0xff] %v263
    %280 = vst [vmem:[#allocation2 + $0x18] sm:$0xff] %v264
    %281 = vst [vmem:[#allocation2 + $0x20] sm:$0xff] %v265
    %282 = vst [vmem:[#allocation2 + $0x28] sm:$0xff] %v266
    %283 = vst [vmem:[#allocation2 + $0x30] sm:$0xff] %v267
    %284 = vst [vmem:[#allocation2 + $0x38] sm:$0xff] %v268
    %285 = vst [vmem:[#allocation2 + $0x40] sm:$0xff] %v269
    %286 = vst [vmem:[#allocation2 + $0x48] sm:$0xff] %v270
    %287 = vst [vmem:[#allocation2 + $0x50] sm:$0xff] %v271
    %288 = vst [vmem:[#allocation2 + $0x58] sm:$0xff] %v272
    %289 = vst [vmem:[#allocation2 + $0x60] sm:$0xff] %v273
    %290 = vst [vmem:[#allocation2 + $0x68] sm:$0xff] %v274
    %291 = vst [vmem:[#allocation2 + $0x70] sm:$0xff] %v275
    %292 = vst [vmem:[#allocation2 + $0x78] sm:$0xff] %v276
    // Predicated region
    $region34: #{tpu_custom_call.1} parent=1 // pred_check
      %p293 = pneg %p48
    $region35: #{tpu_custom_call.1} parent=1 // pred_check_branch
      %295 = sbr.rel (%p293) target = $region37
    $region36: #{tpu_custom_call.1} parent=1 // pred_region
      %s296 = sld [smem:[#allocation7]]
      %v297 = vld [vmem:[%s2] sm:$0xff]
      %v298 = vld [vmem:[%s2 + $0x8] sm:$0xff]
      %v299 = vld [vmem:[%s2 + $0x10] sm:$0xff]
      %v300 = vld [vmem:[%s2 + $0x18] sm:$0xff]
      %v301 = vld [vmem:[%s2 + $0x20] sm:$0xff]
      %v302 = vld [vmem:[%s2 + $0x28] sm:$0xff]
      %v303 = vld [vmem:[%s2 + $0x30] sm:$0xff]
      %v304 = vld [vmem:[%s2 + $0x38] sm:$0xff]
      %v305 = vld [vmem:[%s2 + $0x40] sm:$0xff]
      %v306 = vld [vmem:[%s2 + $0x48] sm:$0xff]
      %v307 = vld [vmem:[%s2 + $0x50] sm:$0xff]
      %v308 = vld [vmem:[%s2 + $0x58] sm:$0xff]
      %v309 = vld [vmem:[%s2 + $0x60] sm:$0xff]
      %v310 = vld [vmem:[%s2 + $0x68] sm:$0xff]
      %v311 = vld [vmem:[%s2 + $0x70] sm:$0xff]
      %v312 = vld [vmem:[%s2 + $0x78] sm:$0xff]
      %v313 = vld [vmem:[%s3] sm:$0x1]
      %315 = vset.pattern.permute.xlu0 0
      %316 = vperm.xlu0 %315, %v297
      %v317 = vpop.permute.xlu0 %316
      %320 = vset.pattern.permute.xlu0 0
      %321 = vperm.xlu0 %320, %v298
      %v322 = vpop.permute.xlu0 %321
      %325 = vset.pattern.permute.xlu0 0
      %326 = vperm.xlu0 %325, %v299
      %v327 = vpop.permute.xlu0 %326
      %330 = vset.pattern.permute.xlu0 0
      %331 = vperm.xlu0 %330, %v300
      %v332 = vpop.permute.xlu0 %331
      %335 = vset.pattern.permute.xlu0 0
      %336 = vperm.xlu0 %335, %v301
      %v337 = vpop.permute.xlu0 %336
      %340 = vset.pattern.permute.xlu0 0
      %341 = vperm.xlu0 %340, %v302
      %v342 = vpop.permute.xlu0 %341
      %345 = vset.pattern.permute.xlu0 0
      %346 = vperm.xlu0 %345, %v303
      %v347 = vpop.permute.xlu0 %346
      %350 = vset.pattern.permute.xlu0 0
      %351 = vperm.xlu0 %350, %v304
      %v352 = vpop.permute.xlu0 %351
      %355 = vset.pattern.permute.xlu0 0
      %356 = vperm.xlu0 %355, %v305
      %v357 = vpop.permute.xlu0 %356
      %360 = vset.pattern.permute.xlu0 0
      %361 = vperm.xlu0 %360, %v306
      %v362 = vpop.permute.xlu0 %361
      %365 = vset.pattern.permute.xlu0 0
      %366 = vperm.xlu0 %365, %v307
      %v367 = vpop.permute.xlu0 %366
      %370 = vset.pattern.permute.xlu0 0
      %371 = vperm.xlu0 %370, %v308
      %v372 = vpop.permute.xlu0 %371
      %375 = vset.pattern.permute.xlu0 0
      %376 = vperm.xlu0 %375, %v309
      %v377 = vpop.permute.xlu0 %376
      %380 = vset.pattern.permute.xlu0 0
      %381 = vperm.xlu0 %380, %v310
      %v382 = vpop.permute.xlu0 %381
      %385 = vset.pattern.permute.xlu0 0
      %386 = vperm.xlu0 %385, %v311
      %v387 = vpop.permute.xlu0 %386
      %390 = vset.pattern.permute.xlu0 0
      %391 = vperm.xlu0 %390, %v312
      %v392 = vpop.permute.xlu0 %391
      %v395 = vlaneseq
      %v396 = vshrl.u32 %v395, 7
      %v397 = vsub.s32 0, %v396
      %v398 = vrot.slane %v313, %v397
      %v400 = vadd.f32 %v317, %v398
      %v401 = vadd.f32 %v322, %v398
      %v402 = vadd.f32 %v327, %v398
      %v403 = vadd.f32 %v332, %v398
      %v404 = vadd.f32 %v337, %v398
      %v405 = vadd.f32 %v342, %v398
      %v406 = vadd.f32 %v347, %v398
      %v407 = vadd.f32 %v352, %v398
      %v408 = vadd.f32 %v357, %v398
      %v409 = vadd.f32 %v362, %v398
      %v410 = vadd.f32 %v367, %v398
      %v411 = vadd.f32 %v372, %v398
      %v412 = vadd.f32 %v377, %v398
      %v413 = vadd.f32 %v382, %v398
      %v414 = vadd.f32 %v387, %v398
      %v415 = vadd.f32 %v392, %v398
      %v416 = vld [vmem:[#allocation2] sm:$0xff]
      %v417 = vld [vmem:[#allocation2 + $0x8] sm:$0xff]
      %v418 = vld [vmem:[#allocation2 + $0x10] sm:$0xff]
      %v419 = vld [vmem:[#allocation2 + $0x18] sm:$0xff]
      %v420 = vld [vmem:[#allocation2 + $0x20] sm:$0xff]
      %v421 = vld [vmem:[#allocation2 + $0x28] sm:$0xff]
      %v422 = vld [vmem:[#allocation2 + $0x30] sm:$0xff]
      %v423 = vld [vmem:[#allocation2 + $0x38] sm:$0xff]
      %v424 = vld [vmem:[#allocation2 + $0x40] sm:$0xff]
      %v425 = vld [vmem:[#allocation2 + $0x48] sm:$0xff]
      %v426 = vld [vmem:[#allocation2 + $0x50] sm:$0xff]
      %v427 = vld [vmem:[#allocation2 + $0x58] sm:$0xff]
      %v428 = vld [vmem:[#allocation2 + $0x60] sm:$0xff]
      %v429 = vld [vmem:[#allocation2 + $0x68] sm:$0xff]
      %v430 = vld [vmem:[#allocation2 + $0x70] sm:$0xff]
      %v431 = vld [vmem:[#allocation2 + $0x78] sm:$0xff]
      %v432 = vmul.f32 %v416, 2.0
      %v433 = vmul.f32 %v417, 2.0
      %v434 = vmul.f32 %v418, 2.0
      %v435 = vmul.f32 %v419, 2.0
      %v436 = vmul.f32 %v420, 2.0
      %v437 = vmul.f32 %v421, 2.0
      %v438 = vmul.f32 %v422, 2.0
      %v439 = vmul.f32 %v423, 2.0
      %v440 = vmul.f32 %v424, 2.0
      %v441 = vmul.f32 %v425, 2.0
      %v442 = vmul.f32 %v426, 2.0
      %v443 = vmul.f32 %v427, 2.0
      %v444 = vmul.f32 %v428, 2.0
      %v445 = vmul.f32 %v429, 2.0
      %v446 = vmul.f32 %v430, 2.0
      %v447 = vmul.f32 %v431, 2.0
      %v448 = vsub.f32 %v400, %v432
      %v449 = vsub.f32 %v401, %v433
      %v450 = vsub.f32 %v402, %v434
      %v451 = vsub.f32 %v403, %v435
      %v452 = vsub.f32 %v404, %v436
      %v453 = vsub.f32 %v405, %v437
      %v454 = vsub.f32 %v406, %v438
      %v455 = vsub.f32 %v407, %v439
      %v456 = vsub.f32 %v408, %v440
      %v457 = vsub.f32 %v409, %v441
      %v458 = vsub.f32 %v410, %v442
      %v459 = vsub.f32 %v411, %v443
      %v460 = vsub.f32 %v412, %v444
      %v461 = vsub.f32 %v413, %v445
      %v462 = vsub.f32 %v414, %v446
      %v463 = vsub.f32 %v415, %v447
      %v464 = vmax.f32 %v448, 0.0
      %v465 = vmax.f32 %v449, 0.0
      %v466 = vmax.f32 %v450, 0.0
      %v467 = vmax.f32 %v451, 0.0
      %v468 = vmax.f32 %v452, 0.0
      %v469 = vmax.f32 %v453, 0.0
      %v470 = vmax.f32 %v454, 0.0
      %v471 = vmax.f32 %v455, 0.0
      %v472 = vmax.f32 %v456, 0.0
      %v473 = vmax.f32 %v457, 0.0
      %v474 = vmax.f32 %v458, 0.0
      %v475 = vmax.f32 %v459, 0.0
      %v476 = vmax.f32 %v460, 0.0
      %v477 = vmax.f32 %v461, 0.0
      %v478 = vmax.f32 %v462, 0.0
      %v479 = vmax.f32 %v463, 0.0
      %v480 = vmul.f32 %v464, -0.5
      %v481 = vmul.f32 %v465, -0.5
      %v482 = vmul.f32 %v466, -0.5
      %v483 = vmul.f32 %v467, -0.5
      %v484 = vmul.f32 %v468, -0.5
      %v485 = vmul.f32 %v469, -0.5
      %v486 = vmul.f32 %v470, -0.5
      %v487 = vmul.f32 %v471, -0.5
      %v488 = vmul.f32 %v472, -0.5
      %v489 = vmul.f32 %v473, -0.5
      %v490 = vmul.f32 %v474, -0.5
      %v491 = vmul.f32 %v475, -0.5
      %v492 = vmul.f32 %v476, -0.5
      %v493 = vmul.f32 %v477, -0.5
      %v494 = vmul.f32 %v478, -0.5
      %v495 = vmul.f32 %v479, -0.5
      %v496 = vmul.f32 %v480, 1.442695
      %v497 = vpow.pop %v496
      %v498 = vmul.f32 %v481, 1.442695
      %v499 = vpow.pop %v498
      %v500 = vmul.f32 %v482, 1.442695
      %v501 = vpow.pop %v500
      %v502 = vmul.f32 %v483, 1.442695
      %v503 = vpow.pop %v502
      %v504 = vmul.f32 %v484, 1.442695
      %v505 = vpow.pop %v504
      %v506 = vmul.f32 %v485, 1.442695
      %v507 = vpow.pop %v506
      %v508 = vmul.f32 %v486, 1.442695
      %v509 = vpow.pop %v508
      %v510 = vmul.f32 %v487, 1.442695
      %v511 = vpow.pop %v510
      %v512 = vmul.f32 %v488, 1.442695
      %v513 = vpow.pop %v512
      %v514 = vmul.f32 %v489, 1.442695
      %v515 = vpow.pop %v514
      %v516 = vmul.f32 %v490, 1.442695
      %v517 = vpow.pop %v516
      %v518 = vmul.f32 %v491, 1.442695
      %v519 = vpow.pop %v518
      %v520 = vmul.f32 %v492, 1.442695
      %v521 = vpow.pop %v520
      %v522 = vmul.f32 %v493, 1.442695
      %v523 = vpow.pop %v522
      %v524 = vmul.f32 %v494, 1.442695
      %v525 = vpow.pop %v524
      %v526 = vmul.f32 %v495, 1.442695
      %v527 = vpow.pop %v526
      %v528 = vstv %s296
      %v529 = vmul.f32 %v528, %v497
      %v530 = vmul.f32 %v528, %v499
      %v531 = vmul.f32 %v528, %v501
      %v532 = vmul.f32 %v528, %v503
      %v533 = vmul.f32 %v528, %v505
      %v534 = vmul.f32 %v528, %v507
      %v535 = vmul.f32 %v528, %v509
      %v536 = vmul.f32 %v528, %v511
      %v537 = vmul.f32 %v528, %v513
      %v538 = vmul.f32 %v528, %v515
      %v539 = vmul.f32 %v528, %v517
      %v540 = vmul.f32 %v528, %v519
      %v541 = vmul.f32 %v528, %v521
      %v542 = vmul.f32 %v528, %v523
      %v543 = vmul.f32 %v528, %v525
      %v544 = vmul.f32 %v528, %v527
      %545 = vst [vmem:[#allocation8] sm:$0xff] %v529
      %546 = vst [vmem:[#allocation8 + $0x8] sm:$0xff] %v530
      %547 = vst [vmem:[#allocation8 + $0x10] sm:$0xff] %v531
      %548 = vst [vmem:[#allocation8 + $0x18] sm:$0xff] %v532
      %549 = vst [vmem:[#allocation8 + $0x20] sm:$0xff] %v533
      %550 = vst [vmem:[#allocation8 + $0x28] sm:$0xff] %v534
      %551 = vst [vmem:[#allocation8 + $0x30] sm:$0xff] %v535
      %552 = vst [vmem:[#allocation8 + $0x38] sm:$0xff] %v536
      %553 = vst [vmem:[#allocation8 + $0x40] sm:$0xff] %v537
      %554 = vst [vmem:[#allocation8 + $0x48] sm:$0xff] %v538
      %555 = vst [vmem:[#allocation8 + $0x50] sm:$0xff] %v539
      %556 = vst [vmem:[#allocation8 + $0x58] sm:$0xff] %v540
      %557 = vst [vmem:[#allocation8 + $0x60] sm:$0xff] %v541
      %558 = vst [vmem:[#allocation8 + $0x68] sm:$0xff] %v542
      %559 = vst [vmem:[#allocation8 + $0x70] sm:$0xff] %v543
      %560 = vst [vmem:[#allocation8 + $0x78] sm:$0xff] %v544
      %s561 = sld [smem:[#allocation7 + $0x1]]
      %s562 = smul.u32 0, 128
      %s563 = smul.u32 0, 128
      %s564 = sadd.s32 %s563, 128
      %p565 = scmp.lt.s32.totalorder %s562, %s564
      %s566 = sadd.s32 %s562, 128
      %p567 = scmp.lt.s32.totalorder %s563, %s566
      %p568 = pnand %p565, %p567
      %p569 = pneg %p568
      // Predicated region
      $region38: #{tpu_custom_call.1} parent=36 // pred_check
        _
      $region39: #{tpu_custom_call.1} parent=36 // pred_check_branch
        %571 = sbr.rel (%p568) target = $region41
      $region40: #{tpu_custom_call.1} parent=36 // pred_region
        %v572 = vlaneseq
        %v573 = vshrl.u32 %v572, 7
        %v574 = vadd.s32 %v573, 8
        %v575 = vadd.s32 %v573, 16
        %v576 = vadd.s32 %v573, 24
        %v577 = vadd.s32 %v573, 32
        %v578 = vadd.s32 %v573, 40
        %v579 = vadd.s32 %v573, 48
        %v580 = vadd.s32 %v573, 56
        %v581 = vadd.s32 %v573, 64
        %v582 = vadd.s32 %v573, 72
        %v583 = vadd.s32 %v573, 80
        %v584 = vadd.s32 %v573, 88
        %v585 = vadd.s32 %v573, 96
        %v586 = vadd.s32 %v573, 104
        %v587 = vadd.s32 %v573, 112
        %v588 = vadd.s32 %v573, 120
        %v589 = vstv %s562
        %v590 = vadd.s32 %v589, %v573
        %v591 = vadd.s32 %v589, %v574
        %v592 = vadd.s32 %v589, %v575
        %v593 = vadd.s32 %v589, %v576
        %v594 = vadd.s32 %v589, %v577
        %v595 = vadd.s32 %v589, %v578
        %v596 = vadd.s32 %v589, %v579
        %v597 = vadd.s32 %v589, %v580
        %v598 = vadd.s32 %v589, %v581
        %v599 = vadd.s32 %v589, %v582
        %v600 = vadd.s32 %v589, %v583
        %v601 = vadd.s32 %v589, %v584
        %v602 = vadd.s32 %v589, %v585
        %v603 = vadd.s32 %v589, %v586
        %v604 = vadd.s32 %v589, %v587
        %v605 = vadd.s32 %v589, %v588
        %v606 = vlaneseq
        %v607 = vand.u32 %v606, 127
        %v608 = vstv %s563
        %v609 = vadd.s32 %v608, %v607
        %vm610 = vcmp.eq.s32.totalorder %v590, %v609
        %vm611 = vcmp.eq.s32.totalorder %v591, %v609
        %vm612 = vcmp.eq.s32.totalorder %v592, %v609
        %vm613 = vcmp.eq.s32.totalorder %v593, %v609
        %vm614 = vcmp.eq.s32.totalorder %v594, %v609
        %vm615 = vcmp.eq.s32.totalorder %v595, %v609
        %vm616 = vcmp.eq.s32.totalorder %v596, %v609
        %vm617 = vcmp.eq.s32.totalorder %v597, %v609
        %vm618 = vcmp.eq.s32.totalorder %v598, %v609
        %vm619 = vcmp.eq.s32.totalorder %v599, %v609
        %vm620 = vcmp.eq.s32.totalorder %v600, %v609
        %vm621 = vcmp.eq.s32.totalorder %v601, %v609
        %vm622 = vcmp.eq.s32.totalorder %v602, %v609
        %vm623 = vcmp.eq.s32.totalorder %v603, %v609
        %vm624 = vcmp.eq.s32.totalorder %v604, %v609
        %vm625 = vcmp.eq.s32.totalorder %v605, %v609
        %v626 = vstv %s561
        %v627 = vsel %vm610, %v626, 0.0
        %v628 = vsel %vm611, %v626, 0.0
        %v629 = vsel %vm612, %v626, 0.0
        %v630 = vsel %vm613, %v626, 0.0
        %v631 = vsel %vm614, %v626, 0.0
        %v632 = vsel %vm615, %v626, 0.0
        %v633 = vsel %vm616, %v626, 0.0
        %v634 = vsel %vm617, %v626, 0.0
        %v635 = vsel %vm618, %v626, 0.0
        %v636 = vsel %vm619, %v626, 0.0
        %v637 = vsel %vm620, %v626, 0.0
        %v638 = vsel %vm621, %v626, 0.0
        %v639 = vsel %vm622, %v626, 0.0
        %v640 = vsel %vm623, %v626, 0.0
        %v641 = vsel %vm624, %v626, 0.0
        %v642 = vsel %vm625, %v626, 0.0
        %v643 = vadd.f32 %v529, %v627
        %v644 = vadd.f32 %v530, %v628
        %v645 = vadd.f32 %v531, %v629
        %v646 = vadd.f32 %v532, %v630
        %v647 = vadd.f32 %v533, %v631
        %v648 = vadd.f32 %v534, %v632
        %v649 = vadd.f32 %v535, %v633
        %v650 = vadd.f32 %v536, %v634
        %v651 = vadd.f32 %v537, %v635
        %v652 = vadd.f32 %v538, %v636
        %v653 = vadd.f32 %v539, %v637
        %v654 = vadd.f32 %v540, %v638
        %v655 = vadd.f32 %v541, %v639
        %v656 = vadd.f32 %v542, %v640
        %v657 = vadd.f32 %v543, %v641
        %v658 = vadd.f32 %v544, %v642
        %659 = vst [vmem:[#allocation8] sm:$0xff] %v643
        %660 = vst [vmem:[#allocation8 + $0x8] sm:$0xff] %v644
        %661 = vst [vmem:[#allocation8 + $0x10] sm:$0xff] %v645
        %662 = vst [vmem:[#allocation8 + $0x18] sm:$0xff] %v646
        %663 = vst [vmem:[#allocation8 + $0x20] sm:$0xff] %v647
        %664 = vst [vmem:[#allocation8 + $0x28] sm:$0xff] %v648
        %665 = vst [vmem:[#allocation8 + $0x30] sm:$0xff] %v649
        %666 = vst [vmem:[#allocation8 + $0x38] sm:$0xff] %v650
        %667 = vst [vmem:[#allocation8 + $0x40] sm:$0xff] %v651
        %668 = vst [vmem:[#allocation8 + $0x48] sm:$0xff] %v652
        %669 = vst [vmem:[#allocation8 + $0x50] sm:$0xff] %v653
        %670 = vst [vmem:[#allocation8 + $0x58] sm:$0xff] %v654
        %671 = vst [vmem:[#allocation8 + $0x60] sm:$0xff] %v655
        %672 = vst [vmem:[#allocation8 + $0x68] sm:$0xff] %v656
        %673 = vst [vmem:[#allocation8 + $0x70] sm:$0xff] %v657
        %674 = vst [vmem:[#allocation8 + $0x78] sm:$0xff] %v658
      $region41: #{tpu_custom_call.1} parent=36 // pred_fallthru
        _
    $region37: #{tpu_custom_call.1} parent=1 // pred_fallthru
      _
    // Predicated region
    $region42: #{tpu_custom_call.1} parent=1 // pred_check
      _
    $region43: #{tpu_custom_call.1} parent=1 // pred_check_branch
      %676 = sbr.rel (0) target = $region45
    $region44: #{tpu_custom_call.1} parent=1 // pred_region
      %s678 = ssub.s32 2048, 2048
      %679 = vsyncadd [#allocation5], %s678
      %s680 = sshll.u32 [#allocation8], 4
      %s681 = int_to_ptr.vmem [resolvable:$true] %s680
      %686 = dma.vmem_to_hbm [thread:$0]  %s681, 2048, %s5, [#allocation5], 128, 128, 8
    $region45: #{tpu_custom_call.1} parent=1 // pred_fallthru
      _
    // Predicated region
    $region46: #{tpu_custom_call.1} parent=1 // pred_check
      _
    $region47: #{tpu_custom_call.1} parent=1 // pred_check_branch
      %688 = sbr.rel (0) target = $region49
    $region48: #{tpu_custom_call.1} parent=1 // pred_region
      %689 = dma.done [#allocation5], 2048
    $region49: #{tpu_custom_call.1} parent=1 // pred_fallthru
      _
    %690 = vsyncpa [#allocation4], 1
    %691 = vsyncpa [#allocation5], 1
    %692 = vsyncpa [#allocation6], 1

</llo_original>
